<compile_context>
chip_gen: v7x
topology: tpu7x:2x2x1
jax: 0.10.0
libtpu: 0.0.40
codegen_flags: <defaults>
</compile_context>

<pallas_src>
import functools
import math

import jax
import jax.numpy as jnp
from jax.experimental import pallas as pl
from jax.experimental.pallas import tpu as pltpu

_VMEM_LIMIT = 48 * 1024 * 1024      # safe with headroom on v5e/v6e (128 MiB) and v7x (64 MiB)
_FUSE_BYTES = 2 * 1024 * 1024       # adj smaller than this -> fully-fused single-call path


def _round_up(x, m):
    return ((x + m - 1) // m) * m


def _pad2d(a, shape):
    if a.shape == tuple(shape):
        return a
    return jnp.pad(a, [(0, t - s) for s, t in zip(a.shape, shape)])


# ---------------------------------------------------------------------------
# Tiled matmul + epilogue kernel:  out = act(A @ B + bias)
#   grid = (M // TM, K // TK); row axis parallel (megacore), K axis arbitrary.
#   A tile: (TM, TK)        (bf16 or f32, streamed / double-buffered)
#   B tile: (TK, F_out)     (F_out untiled: required for row-wise log_softmax)
#   bias:   (1, F_out) f32
#   acc:    (TM, F_out) f32 VMEM scratch; zeroed at k==0, epilogue at k==last.
# ---------------------------------------------------------------------------
def _mm_kernel(a_ref, b_ref, bias_ref, o_ref, acc_ref, *, relu, log_softmax):
    k = pl.program_id(1)

    @pl.when(k == 0)
    def _():
        acc_ref[...] = jnp.zeros_like(acc_ref)

    acc_ref[...] += jnp.dot(a_ref[...], b_ref[...],
                            preferred_element_type=jnp.float32)

    @pl.when(k == pl.num_programs(1) - 1)
    def _():
        out = acc_ref[...] + bias_ref[...]           # epilogue entirely in f32 (v5e-safe)
        if relu:
            out = jnp.maximum(out, 0.0)
        if log_softmax:
            m = jnp.max(out, axis=1, keepdims=True)
            out = out - (jnp.log(jnp.sum(jnp.exp(out - m), axis=1,
                                         keepdims=True)) + m)
        o_ref[...] = out.astype(o_ref.dtype)


def _matmul_bias_act(a, b, bias, *, relu=False, log_softmax=False,
                     out_dtype=jnp.float32, tm=512, tk=1024):
    m, kdim = a.shape
    kdim2, n = b.shape
    assert kdim == kdim2 and bias.shape == (n,)

    tm = min(tm, _round_up(m, 8))        # sublane-aligned row tile
    tk = min(tk, _round_up(kdim, 128))   # lane-aligned contraction tile
    mp, kp = _round_up(m, tm), _round_up(kdim, tk)
    a_p = _pad2d(a, (mp, kp))            # zero pad is exact for the matmul
    b_p = _pad2d(b, (kp, n))
    bias2d = bias.reshape(1, n).astype(jnp.float32)

    kernel = functools.partial(_mm_kernel, relu=relu, log_softmax=log_softmax)
    out = pl.pallas_call(
        kernel,
        out_shape=jax.ShapeDtypeStruct((mp, n), out_dtype),
        grid_spec=pltpu.PrefetchScalarGridSpec(
            num_scalar_prefetch=0,
            grid=(mp // tm, kp // tk),
            in_specs=[
                pl.BlockSpec((tm, tk), lambda i, k: (i, k)),
                pl.BlockSpec((tk, n), lambda i, k: (k, 0)),
                pl.BlockSpec((1, n), lambda i, k: (0, 0)),
            ],
            out_specs=pl.BlockSpec((tm, n), lambda i, k: (i, 0)),
            scratch_shapes=[pltpu.VMEM((tm, n), jnp.float32)],
        ),
        compiler_params=pltpu.CompilerParams(
            dimension_semantics=("parallel", "arbitrary"),
            vmem_limit_bytes=_VMEM_LIMIT),
    )(a_p, b_p, bias2d)
    return out[:m] if mp != m else out


# ---------------------------------------------------------------------------
# Fully-fused small-problem kernel: whole forward in one call, h stays in VMEM.
# ---------------------------------------------------------------------------
def _gcn_fused_kernel(x_ref, adj_ref, w1_ref, b1_ref, wl_ref, bl_ref,
                      w2_ref, b2_ref, o_ref, *, layer):
    adj = adj_ref[...]

    def gc(inp, w_ref, b_ref, relu):
        s = jnp.dot(inp.astype(w_ref.dtype), w_ref[...],
                    preferred_element_type=jnp.float32)
        o = jnp.dot(adj, s.astype(adj.dtype),
                    preferred_element_type=jnp.float32) + b_ref[...]
        return jnp.maximum(o, 0.0) if relu else o

    h = gc(x_ref[...], w1_ref, b1_ref, relu=True)
    for _ in range(layer - 2):
        h = gc(h, wl_ref, bl_ref, relu=True)
    if layer > 1:
        h = gc(h, w2_ref, b2_ref, relu=False)
    m = jnp.max(h, axis=1, keepdims=True)
    h = h - (jnp.log(jnp.sum(jnp.exp(h - m), axis=1, keepdims=True)) + m)
    o_ref[...] = h.astype(o_ref.dtype)


def _gcn_fused_call(x, adj, params, layer, compute_dtype):
    n = x.shape[0]
    cd, f32 = compute_dtype, jnp.float32
    out_f = params["w2"].shape[1] if layer > 1 else params["w1"].shape[1]
    args = (x.astype(cd), adj.astype(cd),
            params["w1"].astype(cd), params["b1"].reshape(1, -1).astype(f32),
            params["wl"].astype(cd), params["bl"].reshape(1, -1).astype(f32),
            params["w2"].astype(cd), params["b2"].reshape(1, -1).astype(f32))
    kernel = functools.partial(_gcn_fused_kernel, layer=layer)
    return pl.pallas_call(
        kernel,
        out_shape=jax.ShapeDtypeStruct((n, out_f), f32),
        grid_spec=pltpu.PrefetchScalarGridSpec(
            num_scalar_prefetch=0,
            grid=(1,),
            in_specs=[pl.BlockSpec(a.shape, lambda i: (0, 0)) for a in args],
            out_specs=pl.BlockSpec((n, out_f), lambda i: (0, 0)),
        ),
        compiler_params=pltpu.CompilerParams(
            dimension_semantics=("arbitrary",),
            vmem_limit_bytes=_VMEM_LIMIT),
    )(*args)


# ---------------------------------------------------------------------------
# GCN forward
# ---------------------------------------------------------------------------
def gcn_forward(x, adj, idx, params, layer=2, *, compute_dtype=jnp.bfloat16,
                tm=512, tk=1024, force_tiled=False):
    """Eval-mode GCN forward matching the PyTorch module."""
    cd, f32 = compute_dtype, jnp.float32
    w1, b1 = params["w1"], params["b1"]
    wl, bl = params["wl"], params["bl"]
    w2, b2 = params["w2"], params["b2"]

    if not force_tiled and adj.size * jnp.dtype(cd).itemsize <= _FUSE_BYTES:
        # tiny problem: single launch, no intermediate HBM traffic
        return _gcn_fused_call(x, adj, params, layer, cd)[idx]

    mm = functools.partial(_matmul_bias_act, tm=tm, tk=tk)
    adj_c = adj.astype(cd)
    adj_sel = adj[idx].astype(cd)      # only rows the last layer actually needs

    if layer == 1:
        support = mm(x.astype(cd), w1.astype(cd),
                     jnp.zeros((w1.shape[1],), f32), out_dtype=cd)
        return mm(adj_sel, support, b1.astype(f32),
                  relu=True, log_softmax=True, out_dtype=f32)

    # pad hidden width to a lane-dense multiple of 128 (exact: padded columns
    # stay identically zero through relu and the following matmuls)
    nhid = w1.shape[1]
    nhid_p = _round_up(nhid, 128)
    w1p = _pad2d(w1, (w1.shape[0], nhid_p)).astype(cd)
    b1p = _pad2d(b1.reshape(1, -1), (1, nhid_p)).reshape(-1).astype(f32)
    wlp = _pad2d(wl, (nhid_p, nhid_p)).astype(cd)
    blp = _pad2d(bl.reshape(1, -1), (1, nhid_p)).reshape(-1).astype(f32)
    w2p = _pad2d(w2, (nhid_p, w2.shape[1])).astype(cd)
    zeros_h = jnp.zeros((nhid_p,), f32)

    def hidden(inp, w, b):
        # support = inp @ w hoisted into its own tiled matmul (computed once,
        # not per adj row-tile), then streamed as the RHS of adj @ support.
        support = mm(inp.astype(cd), w, zeros_h, out_dtype=cd)
        return mm(adj_c, support, b, relu=True, out_dtype=cd)

    h = hidden(x, w1p, b1p)
    for _ in range(layer - 2):
        h = hidden(h, wlp, blp)

    support = mm(h, w2p, jnp.zeros((w2.shape[1],), f32), out_dtype=cd)
    return mm(adj_sel, support, b2.astype(f32), log_softmax=True, out_dtype=f32)


# ---------------------------------------------------------------------------
# Params / demo
# ---------------------------------------------------------------------------
def _uniform_init(key, shape, bound):
    return jax.random.uniform(key, shape, jnp.float32, minval=-bound, maxval=bound)


def init_params(key, nfeat, nhid, nclass):
    # Kipf GraphConvolution init: U(-1/sqrt(out), 1/sqrt(out)) for weight & bias
    ks = jax.random.split(key, 6)
    s1, sl, s2 = 1.0 / math.sqrt(nhid), 1.0 / math.sqrt(nhid), 1.0 / math.sqrt(nclass)
    return {
        "w1": _uniform_init(ks[0], (nfeat, nhid), s1),
        "b1": _uniform_init(ks[1], (nhid,), s1),
        "wl": _uniform_init(ks[2], (nhid, nhid), sl),
        "bl": _uniform_init(ks[3], (nhid,), sl),
        "w2": _uniform_init(ks[4], (nhid, nclass), s2),
        "b2": _uniform_init(ks[5], (nclass,), s2),
    }


def _make_graph(key, n, nfeat):
    k_x, k_adj = jax.random.split(key)
    x = jax.random.normal(k_x, (n, nfeat), jnp.float32)
    a = (jax.random.uniform(k_adj, (n, n)) < 0.3).astype(jnp.float32)
    a = jnp.maximum(a, a.T) + jnp.eye(n, dtype=jnp.float32)
    adj = a / jnp.sum(a, axis=1, keepdims=True)
    return x, adj


def _ref_forward(x, adj, idx, params, layer):
    with jax.default_matmul_precision("highest"):
        h = jnp.maximum(adj @ (x @ params["w1"]) + params["b1"], 0.0)
        for _ in range(layer - 2):
            h = jnp.maximum(adj @ (h @ params["wl"]) + params["bl"], 0.0)
        if layer > 1:
            h = adj @ (h @ params["w2"]) + params["b2"]
        return jax.nn.log_softmax(h, axis=1)[idx]


if __name__ == "__main__":
    key = jax.random.PRNGKey(0)
    k1, k2, kp1, kp2 = jax.random.split(key, 4)

    # --- case 1: toy size (matches the module demo) -> fully fused single call
    N1, NFEAT1, NHID1, NCLASS1, LAYER1 = 16, 32, 32, 8, 2
    x1, adj1 = _make_graph(k1, N1, NFEAT1)
    idx1 = jnp.array([0, 3, 5, 7], dtype=jnp.int32)
    p1 = init_params(kp1, NFEAT1, NHID1, NCLASS1)
    ref1 = _ref_forward(x1, adj1, idx1, p1, LAYER1)

    out1_bf16 = gcn_forward(x1, adj1, idx1, p1, layer=LAYER1)                 # bf16 streaming
    out1_f32 = gcn_forward(x1, adj1, idx1, p1, layer=LAYER1,
                           compute_dtype=jnp.float32)                          # exactness check
    jax.block_until_ready((out1_bf16, out1_f32))
    assert out1_bf16.shape == (idx1.shape[0], NCLASS1)
    assert jnp.allclose(out1_f32, ref1, atol=1e-3, rtol=1e-3)
    assert jnp.allclose(out1_bf16, ref1, atol=5e-2, rtol=5e-2)

    # --- case 2: larger graph, forced tiled/pipelined path (layer=3 exercises gc_layer,
    #     small tiles so the grid really has multiple row/K steps)
    N2, NFEAT2, NHID2, NCLASS2, LAYER2 = 256, 256, 64, 16, 3
    x2, adj2 = _make_graph(k2, N2, NFEAT2)
    idx2 = jnp.arange(0, 100, 10, dtype=jnp.int32)
    p2 = init_params(kp2, NFEAT2, NHID2, NCLASS2)
    ref2 = _ref_forward(x2, adj2, idx2, p2, LAYER2)

    out2_f32 = gcn_forward(x2, adj2, idx2, p2, layer=LAYER2, force_tiled=True,
                           compute_dtype=jnp.float32, tm=128, tk=128)
    out2_bf16 = gcn_forward(x2, adj2, idx2, p2, layer=LAYER2, force_tiled=True,
                            tm=128, tk=128)
    jax.block_until_ready((out2_f32, out2_bf16))
    assert out2_f32.shape == (idx2.shape[0], NCLASS2)
    assert jnp.allclose(out2_f32, ref2, atol=1e-3, rtol=1e-3)
    assert jnp.allclose(out2_bf16, ref2, atol=5e-2, rtol=5e-2)

    print("KERNEL_OK")
</pallas_src>

<mosaic_0001>
module attributes {stable_mosaic.version = 11 : i64} {
  func.func @_gcn_fused_kernel(%arg0: i32, %arg1: memref<16x32xbf16, #tpu.memory_space<vmem>>, %arg2: memref<16x16xbf16, #tpu.memory_space<vmem>>, %arg3: memref<32x32xbf16, #tpu.memory_space<vmem>>, %arg4: memref<1x32xf32, #tpu.memory_space<vmem>>, %arg5: memref<32x32xbf16, #tpu.memory_space<vmem>>, %arg6: memref<1x32xf32, #tpu.memory_space<vmem>>, %arg7: memref<32x8xbf16, #tpu.memory_space<vmem>>, %arg8: memref<1x8xf32, #tpu.memory_space<vmem>>, %arg9: memref<16x8xf32, #tpu.memory_space<vmem>>) attributes {dimension_semantics = [#tpu.dimension_semantics<arbitrary>], iteration_bounds = array<i64: 1>, scalar_prefetch = 0 : i64, scratch_operands = 0 : i64, tpu.core_type = #tpu.core_type<tc>, window_params = [{pipeline_mode = #tpu.pipeline_mode<synchronous>, transform_indices = @transform_0, window_bounds = array<i64: 16, 32>}, {pipeline_mode = #tpu.pipeline_mode<synchronous>, transform_indices = @transform_1, window_bounds = array<i64: 16, 16>}, {pipeline_mode = #tpu.pipeline_mode<synchronous>, transform_indices = @transform_2, window_bounds = array<i64: 32, 32>}, {pipeline_mode = #tpu.pipeline_mode<synchronous>, transform_indices = @transform_3, window_bounds = array<i64: 1, 32>}, {pipeline_mode = #tpu.pipeline_mode<synchronous>, transform_indices = @transform_4, window_bounds = array<i64: 32, 32>}, {pipeline_mode = #tpu.pipeline_mode<synchronous>, transform_indices = @transform_5, window_bounds = array<i64: 1, 32>}, {pipeline_mode = #tpu.pipeline_mode<synchronous>, transform_indices = @transform_6, window_bounds = array<i64: 32, 8>}, {pipeline_mode = #tpu.pipeline_mode<synchronous>, transform_indices = @transform_7, window_bounds = array<i64: 1, 8>}, {pipeline_mode = #tpu.pipeline_mode<synchronous>, transform_indices = @transform_8, window_bounds = array<i64: 16, 8>}]} {
    %c0 = arith.constant 0 : index
    %c0_0 = arith.constant 0 : index
    %0 = vector.load %arg2[%c0, %c0_0] : memref<16x16xbf16, #tpu.memory_space<vmem>>, vector<16x16xbf16>
    %c0_1 = arith.constant 0 : index
    %c0_2 = arith.constant 0 : index
    %1 = vector.load %arg1[%c0_1, %c0_2] : memref<16x32xbf16, #tpu.memory_space<vmem>>, vector<16x32xbf16>
    %c0_3 = arith.constant 0 : index
    %c0_4 = arith.constant 0 : index
    %2 = vector.load %arg3[%c0_3, %c0_4] : memref<32x32xbf16, #tpu.memory_space<vmem>>, vector<32x32xbf16>
    %cst = arith.constant dense<0.000000e+00> : vector<16x32xf32>
    %3 = tpu.matmul %1, %2, %cst {dimension_numbers = #tpu.dot_dimension_numbers<[1], [0], [0], [1], [0, 0, 1, 1], [], []>} : vector<16x32xbf16>, vector<32x32xbf16>, vector<16x32xf32> -> vector<16x32xf32>
    %4 = arith.truncf %3 : vector<16x32xf32> to vector<16x32xbf16>
    %cst_5 = arith.constant dense<0.000000e+00> : vector<16x32xf32>
    %5 = tpu.matmul %0, %4, %cst_5 {dimension_numbers = #tpu.dot_dimension_numbers<[1], [0], [0], [1], [0, 0, 1, 1], [], []>} : vector<16x16xbf16>, vector<16x32xbf16>, vector<16x32xf32> -> vector<16x32xf32>
    %c0_6 = arith.constant 0 : index
    %c0_7 = arith.constant 0 : index
    %6 = vector.load %arg4[%c0_6, %c0_7] : memref<1x32xf32, #tpu.memory_space<vmem>>, vector<1x32xf32>
    %7 = vector.broadcast %6 : vector<1x32xf32> to vector<16x32xf32>
    %8 = arith.addf %5, %7 : vector<16x32xf32>
    %cst_8 = arith.constant 0.000000e+00 : f32
    %9 = vector.broadcast %cst_8 : f32 to vector<16x32xf32>
    %10 = arith.maximumf %8, %9 : vector<16x32xf32>
    %11 = arith.truncf %10 : vector<16x32xf32> to vector<16x32xbf16>
    %c0_9 = arith.constant 0 : index
    %c0_10 = arith.constant 0 : index
    %12 = vector.load %arg7[%c0_9, %c0_10] : memref<32x8xbf16, #tpu.memory_space<vmem>>, vector<32x8xbf16>
    %cst_11 = arith.constant dense<0.000000e+00> : vector<16x8xf32>
    %13 = tpu.matmul %11, %12, %cst_11 {dimension_numbers = #tpu.dot_dimension_numbers<[1], [0], [0], [1], [0, 0, 1, 1], [], []>} : vector<16x32xbf16>, vector<32x8xbf16>, vector<16x8xf32> -> vector<16x8xf32>
    %14 = arith.truncf %13 : vector<16x8xf32> to vector<16x8xbf16>
    %cst_12 = arith.constant dense<0.000000e+00> : vector<16x8xf32>
    %15 = tpu.matmul %0, %14, %cst_12 {dimension_numbers = #tpu.dot_dimension_numbers<[1], [0], [0], [1], [0, 0, 1, 1], [], []>} : vector<16x16xbf16>, vector<16x8xbf16>, vector<16x8xf32> -> vector<16x8xf32>
    %c0_13 = arith.constant 0 : index
    %c0_14 = arith.constant 0 : index
    %16 = vector.load %arg8[%c0_13, %c0_14] : memref<1x8xf32, #tpu.memory_space<vmem>>, vector<1x8xf32>
    %17 = vector.broadcast %16 : vector<1x8xf32> to vector<16x8xf32>
    %18 = arith.addf %15, %17 : vector<16x8xf32>
    %cst_15 = arith.constant dense<0xFF800000> : vector<16xf32>
    %19 = vector.multi_reduction <maximumf>, %18, %cst_15 [1] : vector<16x8xf32> to vector<16xf32>
    %20 = vector.shape_cast %19 : vector<16xf32> to vector<16x1xf32>
    %21 = vector.broadcast %20 : vector<16x1xf32> to vector<16x8xf32>
    %22 = arith.subf %18, %21 : vector<16x8xf32>
    %23 = math.exp %22 : vector<16x8xf32>
    %cst_16 = arith.constant dense<0.000000e+00> : vector<16xf32>
    %24 = vector.multi_reduction <add>, %23, %cst_16 [1] : vector<16x8xf32> to vector<16xf32>
    %25 = vector.shape_cast %24 : vector<16xf32> to vector<16x1xf32>
    %26 = math.log %25 : vector<16x1xf32>
    %27 = arith.addf %26, %20 : vector<16x1xf32>
    %28 = vector.broadcast %27 : vector<16x1xf32> to vector<16x8xf32>
    %29 = arith.subf %18, %28 : vector<16x8xf32>
    %c0_17 = arith.constant 0 : index
    %c0_18 = arith.constant 0 : index
    %30 = vector.load %arg9[%c0_17, %c0_18] : memref<16x8xf32, #tpu.memory_space<vmem>>, vector<16x8xf32>
    tpu.vector_store %arg9[%c0_17, %c0_18], %29 {strides = array<i32>} : memref<16x8xf32, #tpu.memory_space<vmem>>, vector<16x8xf32>,
    return
  }
  func.func @transform_0(%arg0: i32) -> (i32, i32) {
    %c0_i32 = arith.constant 0 : i32
    %c0_i32_0 = arith.constant 0 : i32
    %c0_i32_1 = arith.constant 0 : i32
    return %c0_i32, %c0_i32_0 : i32, i32
  }
  func.func @transform_1(%arg0: i32) -> (i32, i32) {
    %c0_i32 = arith.constant 0 : i32
    %c0_i32_0 = arith.constant 0 : i32
    %c0_i32_1 = arith.constant 0 : i32
    return %c0_i32, %c0_i32_0 : i32, i32
  }
  func.func @transform_2(%arg0: i32) -> (i32, i32) {
    %c0_i32 = arith.constant 0 : i32
    %c0_i32_0 = arith.constant 0 : i32
    %c0_i32_1 = arith.constant 0 : i32
    return %c0_i32, %c0_i32_0 : i32, i32
  }
  func.func @transform_3(%arg0: i32) -> (i32, i32) {
    %c0_i32 = arith.constant 0 : i32
    %c0_i32_0 = arith.constant 0 : i32
    %c0_i32_1 = arith.constant 0 : i32
    return %c0_i32, %c0_i32_0 : i32, i32
  }
  func.func @transform_4(%arg0: i32) -> (i32, i32) {
    %c0_i32 = arith.constant 0 : i32
    %c0_i32_0 = arith.constant 0 : i32
    %c0_i32_1 = arith.constant 0 : i32
    return %c0_i32, %c0_i32_0 : i32, i32
  }
  func.func @transform_5(%arg0: i32) -> (i32, i32) {
    %c0_i32 = arith.constant 0 : i32
    %c0_i32_0 = arith.constant 0 : i32
    %c0_i32_1 = arith.constant 0 : i32
    return %c0_i32, %c0_i32_0 : i32, i32
  }
  func.func @transform_6(%arg0: i32) -> (i32, i32) {
    %c0_i32 = arith.constant 0 : i32
    %c0_i32_0 = arith.constant 0 : i32
    %c0_i32_1 = arith.constant 0 : i32
    return %c0_i32, %c0_i32_0 : i32, i32
  }
  func.func @transform_7(%arg0: i32) -> (i32, i32) {
    %c0_i32 = arith.constant 0 : i32
    %c0_i32_0 = arith.constant 0 : i32
    %c0_i32_1 = arith.constant 0 : i32
    return %c0_i32, %c0_i32_0 : i32, i32
  }
  func.func @transform_8(%arg0: i32) -> (i32, i32) {
    %c0_i32 = arith.constant 0 : i32
    %c0_i32_0 = arith.constant 0 : i32
    %c0_i32_1 = arith.constant 0 : i32
    return %c0_i32, %c0_i32_0 : i32, i32
  }
}

</mosaic_0001>

<llo_original>
// kernel: tpu_custom_call.1
$region0: #{tpu_custom_call.1}
  #allocation0 [shape = 'u32[]', space=smem, size = 0x4, offset = 0x4, fixed_abs, tag = 'smem constant byte address 0x4 - core index']
  #allocation1 [shape = 'u32[144,128]{1,0:T(1,128)}', space=vmem, size = 0x12000, scoped, tag = 'internal scratch']
  %s0 = inlined_call_operand.hbm [shape: bf16[16,32], index: 0, kind: input, shape index: {}]
  %s1 = inlined_call_operand.hbm [shape: bf16[16,16], index: 1, kind: input, shape index: {}]
  %s2 = inlined_call_operand.vmem [shape: bf16[32,32], index: 2, kind: input, shape index: {}]
  %s3 = inlined_call_operand.vmem [shape: f32[1,32], index: 3, kind: input, shape index: {}]
  %s4 = inlined_call_operand.vmem [shape: bf16[32,32], index: 4, kind: input, shape index: {}]
  %s5 = inlined_call_operand.vmem [shape: f32[1,32], index: 5, kind: input, shape index: {}]
  %s6 = inlined_call_operand.vmem [shape: bf16[32,8], index: 6, kind: input, shape index: {}]
  %s7 = inlined_call_operand.vmem [shape: f32[1,8], index: 7, kind: input, shape index: {}]
  %s8 = inlined_call_operand.vmem [shape: f32[16,8], index: 8, kind: output, shape index: {}]
  %s9 = sld [smem:[#allocation0]]
  $region50: #{tpu_custom_call.1} parent=0
    _
  %s11 = ssub.s32 1, %s9
  %s12 = scalar_select 0, %s11, %s9
  $region1: #{tpu_custom_call.1} parent=0
    #allocation2 [shape = 'u8[4096]{0}', space=vmem, size = 0x1000, scoped, tag = 'input window, operand 0, single buffered']
    #allocation3 [shape = 's32[1]{0}', space=sflag, size = 0x4, scoped, tag = 'scoped memory for tpu_custom_call.1']
    #allocation4 [shape = 'u8[4096]{0}', space=vmem, size = 0x1000, scoped, tag = 'input window, operand 1, single buffered']
    #allocation5 [shape = 's32[1]{0}', space=sflag, size = 0x4, scoped, tag = 'scoped memory for tpu_custom_call.1']
    %13 = vsyncpa [#allocation3], 0
    %14 = vsyncpa [#allocation5], 0
    // Predicated region
    $region2: #{tpu_custom_call.1} parent=1 // pred_check
      _
    $region3: #{tpu_custom_call.1} parent=1 // pred_check_branch
      %16 = sbr.rel (0) target = $region5
    $region4: #{tpu_custom_call.1} parent=1 // pred_region
      %s18 = ssub.s32 128, 128
      %19 = vsyncadd [#allocation3], %s18
      %s20 = sshll.u32 [#allocation2], 4
      %s21 = int_to_ptr.vmem [resolvable:$true] %s20
      %26 = dma.hbm_to_vmem [thread:$0]  %s0, 128, %s21, [#allocation3], 64, 64, 4
    $region5: #{tpu_custom_call.1} parent=1 // pred_fallthru
      _
    // Predicated region
    $region6: #{tpu_custom_call.1} parent=1 // pred_check
      _
    $region7: #{tpu_custom_call.1} parent=1 // pred_check_branch
      %28 = sbr.rel (0) target = $region9
    $region8: #{tpu_custom_call.1} parent=1 // pred_region
      %s30 = ssub.s32 128, 128
      %31 = vsyncadd [#allocation5], %s30
      %s32 = sshll.u32 [#allocation4], 4
      %s33 = int_to_ptr.vmem [resolvable:$true] %s32
      %38 = dma.hbm_to_vmem [thread:$0]  %s1, 128, %s33, [#allocation5], 64, 64, 4
    $region9: #{tpu_custom_call.1} parent=1 // pred_fallthru
      _
    // Predicated region
    $region10: #{tpu_custom_call.1} parent=1 // pred_check
      _
    $region11: #{tpu_custom_call.1} parent=1 // pred_check_branch
      %40 = sbr.rel (0) target = $region13
    $region12: #{tpu_custom_call.1} parent=1 // pred_region
      _
    $region13: #{tpu_custom_call.1} parent=1 // pred_fallthru
      _
    // Predicated region
    $region14: #{tpu_custom_call.1} parent=1 // pred_check
      _
    $region15: #{tpu_custom_call.1} parent=1 // pred_check_branch
      %42 = sbr.rel (0) target = $region17
    $region16: #{tpu_custom_call.1} parent=1 // pred_region
      _
    $region17: #{tpu_custom_call.1} parent=1 // pred_fallthru
      _
    // Predicated region
    $region18: #{tpu_custom_call.1} parent=1 // pred_check
      _
    $region19: #{tpu_custom_call.1} parent=1 // pred_check_branch
      %44 = sbr.rel (0) target = $region21
    $region20: #{tpu_custom_call.1} parent=1 // pred_region
      _
    $region21: #{tpu_custom_call.1} parent=1 // pred_fallthru
      _
    // Predicated region
    $region22: #{tpu_custom_call.1} parent=1 // pred_check
      _
    $region23: #{tpu_custom_call.1} parent=1 // pred_check_branch
      %46 = sbr.rel (0) target = $region25
    $region24: #{tpu_custom_call.1} parent=1 // pred_region
      _
    $region25: #{tpu_custom_call.1} parent=1 // pred_fallthru
      _
    // Predicated region
    $region26: #{tpu_custom_call.1} parent=1 // pred_check
      _
    $region27: #{tpu_custom_call.1} parent=1 // pred_check_branch
      %48 = sbr.rel (0) target = $region29
    $region28: #{tpu_custom_call.1} parent=1 // pred_region
      _
    $region29: #{tpu_custom_call.1} parent=1 // pred_fallthru
      _
    // Predicated region
    $region30: #{tpu_custom_call.1} parent=1 // pred_check
      _
    $region31: #{tpu_custom_call.1} parent=1 // pred_check_branch
      %50 = sbr.rel (0) target = $region33
    $region32: #{tpu_custom_call.1} parent=1 // pred_region
      _
    $region33: #{tpu_custom_call.1} parent=1 // pred_fallthru
      _
    // Predicated region
    $region34: #{tpu_custom_call.1} parent=1 // pred_check
      _
    $region35: #{tpu_custom_call.1} parent=1 // pred_check_branch
      %52 = sbr.rel (0) target = $region37
    $region36: #{tpu_custom_call.1} parent=1 // pred_region
      %53 = dma.done [#allocation3], 128
    $region37: #{tpu_custom_call.1} parent=1 // pred_fallthru
      _
    // Predicated region
    $region38: #{tpu_custom_call.1} parent=1 // pred_check
      _
    $region39: #{tpu_custom_call.1} parent=1 // pred_check_branch
      %55 = sbr.rel (0) target = $region41
    $region40: #{tpu_custom_call.1} parent=1 // pred_region
      %56 = dma.done [#allocation5], 128
    $region41: #{tpu_custom_call.1} parent=1 // pred_fallthru
      _
    %v58 = vld [vmem:[#allocation4] sm:$0xf]
    %v59 = vld [vmem:[#allocation4 + $0x4] sm:$0xf]
    %v60 = vld [vmem:[#allocation2] sm:$0xf]
    %v61 = vld [vmem:[#allocation2 + $0x4] sm:$0xf]
    %v62 = vld [vmem:[%s2] sm:$0xf]
    %v63 = vld [vmem:[%s2 + $0x4] sm:$0xf]
    %v64 = vld [vmem:[%s2 + $0x8] sm:$0xf]
    %v65 = vld [vmem:[%s2 + $0xc] sm:$0xf]
    %v68 = vunpack.c.l.b16 %v60
    %v69 = vunpack.c.l.b16 %v61
    %v70 = vpack.c.b16 %v69, %v68
    %v75 = vunpack.c.l.b16 %v62
    %v76 = vunpack.c.l.b16 %v63
    %v77 = vunpack.c.l.b16 %v64
    %v78 = vunpack.c.l.b16 %v65
    %v79 = vpack.c.b16 %v76, %v75
    %v80 = vpack.c.b16 %v78, %v77
    %vm83 = vcmask 261120
    %v85 = vsel %vm83, %v70, 0
    %87 = vmatprep.subr.bf16.mxu0 0
    %88 = vmatpush1.bf16.msra.mxu0 %v79
    %89 = vmatprep.subr.bf16.mxu0 0
    %90 = vmatpush1.bf16.msra.mxu0 %v80
    %91 = vmatprep.subr.bf16.mxu0 0
    %92 = vmatpush1.bf16.msra.mxu0 0
    %93 = vmatprep.subr.bf16.mxu0 0
    %94 = vmatpush1.bf16.msra.mxu0 0
    %95 = vmatprep.subr.bf16.mxu0 0
    %96 = vmatpush1.bf16.msra.mxu0 0
    %97 = vmatprep.subr.bf16.mxu0 0
    %98 = vmatpush1.bf16.msra.mxu0 0
    %99 = vmatprep.subr.bf16.mxu0 0
    %100 = vmatpush1.bf16.msra.mxu0 0
    %101 = vmatprep.subr.bf16.mxu0 0
    %102 = vmatpush1.bf16.msra.mxu0 0
    %103 = vmatprep.subr.bf16.mxu0 0
    %104 = vmatpush1.bf16.msra.mxu0 0
    %105 = vmatprep.subr.bf16.mxu0 0
    %106 = vmatpush1.bf16.msra.mxu0 0
    %107 = vmatprep.subr.bf16.mxu0 0
    %108 = vmatpush1.bf16.msra.mxu0 0
    %109 = vmatprep.subr.bf16.mxu0 0
    %110 = vmatpush1.bf16.msra.mxu0 0
    %111 = vmatprep.subr.bf16.mxu0 0
    %112 = vmatpush1.bf16.msra.mxu0 0
    %113 = vmatprep.subr.bf16.mxu0 0
    %114 = vmatpush1.bf16.msra.mxu0 0
    %115 = vmatprep.subr.bf16.mxu0 0
    %116 = vmatpush1.bf16.msra.mxu0 0
    %117 = vmatprep.subr.bf16.mxu0 0
    %118 = vmatpush1.bf16.msra.mxu0 0
    %119 = vmatprep.mubr.bf16.mxu0 0
    %120 = vmatmul.mubr.bf16.gmra.mrb[0].mxu0 %v85
    %v121 = vpop.f32.mrb[0].mxu0
    %v122 = vadd.f32 0.0, %v121
    %v123 = vpop.f32.mrb[0].mxu0
    %v124 = vpop.f32.mrb[0].mxu0
    %v125 = vadd.f32 0.0, %v124
    %v126 = vpop.f32.mrb[0].mxu0
    %127 = vdwg.mxu0
    %v128 = vpack.c.bf16 %v125, %v122
    %v129 = vld [vmem:[%s3] sm:$0x1]
    %v131 = vlaneseq
    %v132 = vshrl.u32 %v131, 7
    %v133 = vsub.s32 0, %v132
    %v134 = vrot.slane %v129, %v133
    %v138 = vunpack.c.l.b16 %v58
    %v139 = vunpack.c.l.b16 %v59
    %v140 = vpack.c.b16 %v139, %v138
    %vm141 = vcmask 130048
    %v143 = vsel %vm141, %v140, 0
    %145 = vmatprep.subr.bf16.mxu0 0
    %146 = vmatpush1.bf16.msra.mxu0 %v128
    %147 = vmatprep.subr.bf16.mxu0 0
    %148 = vmatpush1.bf16.msra.mxu0 0
    %149 = vmatprep.subr.bf16.mxu0 0
    %150 = vmatpush1.bf16.msra.mxu0 0
    %151 = vmatprep.subr.bf16.mxu0 0
    %152 = vmatpush1.bf16.msra.mxu0 0
    %153 = vmatprep.subr.bf16.mxu0 0
    %154 = vmatpush1.bf16.msra.mxu0 0
    %155 = vmatprep.subr.bf16.mxu0 0
    %156 = vmatpush1.bf16.msra.mxu0 0
    %157 = vmatprep.subr.bf16.mxu0 0
    %158 = vmatpush1.bf16.msra.mxu0 0
    %159 = vmatprep.subr.bf16.mxu0 0
    %160 = vmatpush1.bf16.msra.mxu0 0
    %161 = vmatprep.subr.bf16.mxu0 0
    %162 = vmatpush1.bf16.msra.mxu0 0
    %163 = vmatprep.subr.bf16.mxu0 0
    %164 = vmatpush1.bf16.msra.mxu0 0
    %165 = vmatprep.subr.bf16.mxu0 0
    %166 = vmatpush1.bf16.msra.mxu0 0
    %167 = vmatprep.subr.bf16.mxu0 0
    %168 = vmatpush1.bf16.msra.mxu0 0
    %169 = vmatprep.subr.bf16.mxu0 0
    %170 = vmatpush1.bf16.msra.mxu0 0
    %171 = vmatprep.subr.bf16.mxu0 0
    %172 = vmatpush1.bf16.msra.mxu0 0
    %173 = vmatprep.subr.bf16.mxu0 0
    %174 = vmatpush1.bf16.msra.mxu0 0
    %175 = vmatprep.subr.bf16.mxu0 0
    %176 = vmatpush1.bf16.msra.mxu0 0
    %177 = vmatprep.mubr.bf16.mxu0 0
    %178 = vmatmul.mubr.bf16.gmra.mrb[0].mxu0 %v143
    %v179 = vpop.f32.mrb[0].mxu0
    %v180 = vadd.f32 %v134, %v179
    %v181 = vpop.f32.mrb[0].mxu0
    %v182 = vpop.f32.mrb[0].mxu0
    %v183 = vadd.f32 %v134, %v182
    %v184 = vpop.f32.mrb[0].mxu0
    %185 = vdwg.mxu0
    %v186 = vmax.f32 %v180, 0.0
    %v187 = vmax.f32 %v183, 0.0
    %v188 = vpack.c.bf16 %v187, %v186
    %v189 = vld [vmem:[%s6] sm:$0xf]
    %v190 = vld [vmem:[%s6 + $0x4] sm:$0xf]
    %v191 = vld [vmem:[%s6 + $0x8] sm:$0xf]
    %v192 = vld [vmem:[%s6 + $0xc] sm:$0xf]
    %v197 = vunpack.c.l.b16 %v189
    %v198 = vunpack.c.l.b16 %v190
    %v199 = vunpack.c.l.b16 %v191
    %v200 = vunpack.c.l.b16 %v192
    %v201 = vpack.c.b16 %v198, %v197
    %v202 = vpack.c.b16 %v200, %v199
    %v206 = vsel %vm83, %v188, 0
    %208 = vmatprep.subr.bf16.mxu0 0
    %209 = vmatpush1.bf16.msra.mxu0 %v201
    %210 = vmatprep.subr.bf16.mxu0 0
    %211 = vmatpush1.bf16.msra.mxu0 %v202
    %212 = vmatprep.subr.bf16.mxu0 0
    %213 = vmatpush1.bf16.msra.mxu0 0
    %214 = vmatprep.subr.bf16.mxu0 0
    %215 = vmatpush1.bf16.msra.mxu0 0
    %216 = vmatprep.subr.bf16.mxu0 0
    %217 = vmatpush1.bf16.msra.mxu0 0
    %218 = vmatprep.subr.bf16.mxu0 0
    %219 = vmatpush1.bf16.msra.mxu0 0
    %220 = vmatprep.subr.bf16.mxu0 0
    %221 = vmatpush1.bf16.msra.mxu0 0
    %222 = vmatprep.subr.bf16.mxu0 0
    %223 = vmatpush1.bf16.msra.mxu0 0
    %224 = vmatprep.subr.bf16.mxu0 0
    %225 = vmatpush1.bf16.msra.mxu0 0
    %226 = vmatprep.subr.bf16.mxu0 0
    %227 = vmatpush1.bf16.msra.mxu0 0
    %228 = vmatprep.subr.bf16.mxu0 0
    %229 = vmatpush1.bf16.msra.mxu0 0
    %230 = vmatprep.subr.bf16.mxu0 0
    %231 = vmatpush1.bf16.msra.mxu0 0
    %232 = vmatprep.subr.bf16.mxu0 0
    %233 = vmatpush1.bf16.msra.mxu0 0
    %234 = vmatprep.subr.bf16.mxu0 0
    %235 = vmatpush1.bf16.msra.mxu0 0
    %236 = vmatprep.subr.bf16.mxu0 0
    %237 = vmatpush1.bf16.msra.mxu0 0
    %238 = vmatprep.subr.bf16.mxu0 0
    %239 = vmatpush1.bf16.msra.mxu0 0
    %240 = vmatprep.mubr.bf16.mxu0 0
    %241 = vmatmul.mubr.bf16.gmra.mrb[0].mxu0 %v206
    %v242 = vpop.f32.mrb[0].mxu0
    %v243 = vadd.f32 0.0, %v242
    %v244 = vpop.f32.mrb[0].mxu0
    %v245 = vpop.f32.mrb[0].mxu0
    %v246 = vadd.f32 0.0, %v245
    %v247 = vpop.f32.mrb[0].mxu0
    %248 = vdwg.mxu0
    %v249 = vpack.c.bf16 %v246, %v243
    %v250 = vld [vmem:[%s7] sm:$0x1]
    %v252 = vlaneseq
    %v253 = vshrl.u32 %v252, 7
    %v254 = vsub.s32 0, %v253
    %v255 = vrot.slane %v250, %v254
    %257 = vmatprep.subr.bf16.mxu0 0
    %258 = vmatpush1.bf16.msra.mxu0 %v249
    %259 = vmatprep.subr.bf16.mxu0 0
    %260 = vmatpush1.bf16.msra.mxu0 0
    %261 = vmatprep.subr.bf16.mxu0 0
    %262 = vmatpush1.bf16.msra.mxu0 0
    %263 = vmatprep.subr.bf16.mxu0 0
    %264 = vmatpush1.bf16.msra.mxu0 0
    %265 = vmatprep.subr.bf16.mxu0 0
    %266 = vmatpush1.bf16.msra.mxu0 0
    %267 = vmatprep.subr.bf16.mxu0 0
    %268 = vmatpush1.bf16.msra.mxu0 0
    %269 = vmatprep.subr.bf16.mxu0 0
    %270 = vmatpush1.bf16.msra.mxu0 0
    %271 = vmatprep.subr.bf16.mxu0 0
    %272 = vmatpush1.bf16.msra.mxu0 0
    %273 = vmatprep.subr.bf16.mxu0 0
    %274 = vmatpush1.bf16.msra.mxu0 0
    %275 = vmatprep.subr.bf16.mxu0 0
    %276 = vmatpush1.bf16.msra.mxu0 0
    %277 = vmatprep.subr.bf16.mxu0 0
    %278 = vmatpush1.bf16.msra.mxu0 0
    %279 = vmatprep.subr.bf16.mxu0 0
    %280 = vmatpush1.bf16.msra.mxu0 0
    %281 = vmatprep.subr.bf16.mxu0 0
    %282 = vmatpush1.bf16.msra.mxu0 0
    %283 = vmatprep.subr.bf16.mxu0 0
    %284 = vmatpush1.bf16.msra.mxu0 0
    %285 = vmatprep.subr.bf16.mxu0 0
    %286 = vmatpush1.bf16.msra.mxu0 0
    %287 = vmatprep.subr.bf16.mxu0 0
    %288 = vmatpush1.bf16.msra.mxu0 0
    %289 = vmatprep.mubr.bf16.mxu0 0
    %290 = vmatmul.mubr.bf16.gmra.mrb[0].mxu0 %v143
    %v291 = vpop.f32.mrb[0].mxu0
    %v292 = vadd.f32 %v255, %v291
    %v293 = vpop.f32.mrb[0].mxu0
    %v294 = vpop.f32.mrb[0].mxu0
    %v295 = vadd.f32 %v255, %v294
    %v296 = vpop.f32.mrb[0].mxu0
    %297 = vdwg.mxu0
    %vm298 = vcmask 64512
    %v299 = vsel %vm298, %v292, -inf
    %300 = vmax.xlane.f32.xlu0 %v299
    %v301 = vpop.xlane.xlu0 %300
    %v302 = vsel %vm298, %v295, -inf
    %303 = vmax.xlane.f32.xlu0 %v302
    %v304 = vpop.xlane.xlu0 %303
    %v305 = vsub.f32 %v292, %v301
    %v306 = vsub.f32 %v295, %v304
    %v307 = vmul.f32 %v305, 1.442695
    %v308 = vpow.pop %v307
    %v309 = vmul.f32 %v306, 1.442695
    %v310 = vpow.pop %v309
    %v311 = vsel %vm298, %v308, 0.0
    %312 = vadd.xlane.f32.xlu0 %v311
    %v313 = vpop.xlane.xlu0 %312
    %v314 = vsel %vm298, %v310, 0.0
    %315 = vadd.xlane.f32.xlu0 %v314
    %v316 = vpop.xlane.xlu0 %315
    %v317 = vlog2.pop %v313
    %v318 = vmul.f32 %v317, 0.6931472
    %v319 = vlog2.pop %v316
    %v320 = vmul.f32 %v319, 0.6931472
    %v321 = vadd.f32 %v318, %v301
    %v322 = vadd.f32 %v320, %v304
    %v323 = vsub.f32 %v292, %v321
    %v324 = vsub.f32 %v295, %v322
    %325 = vst.msk [vmem:[%s8] sm:$0xff] %vm298, %v323
    %326 = vst.msk [vmem:[%s8 + $0x8] sm:$0xff] %vm298, %v324
    // Predicated region
    $region42: #{tpu_custom_call.1} parent=1 // pred_check
      _
    $region43: #{tpu_custom_call.1} parent=1 // pred_check_branch
      %328 = sbr.rel (0) target = $region45
    $region44: #{tpu_custom_call.1} parent=1 // pred_region
      _
    $region45: #{tpu_custom_call.1} parent=1 // pred_fallthru
      _
    // Predicated region
    $region46: #{tpu_custom_call.1} parent=1 // pred_check
      _
    $region47: #{tpu_custom_call.1} parent=1 // pred_check_branch
      %330 = sbr.rel (0) target = $region49
    $region48: #{tpu_custom_call.1} parent=1 // pred_region
      _
    $region49: #{tpu_custom_call.1} parent=1 // pred_fallthru
      _
    %331 = vsyncpa [#allocation3], 1
    %332 = vsyncpa [#allocation5], 1

</llo_original>
